<compile_context>
chip_gen: v5e
topology: v5e:2x2
jax: 0.10.0
libtpu: 0.0.40
codegen_flags: <defaults>
</compile_context>

<pallas_src>
import functools
import math

import jax
import jax.numpy as jnp
from jax.experimental import pallas as pl
from jax.experimental.pallas import tpu as pltpu


# Tile caps: 128-multiples on the lane dims, sized so double-buffered input
# tiles + the f32 output tile stay well under the scoped-VMEM budget on every
# generation once vmem_limit_bytes is raised explicitly below.
_TM_CAP = 512
_TN_CAP = 512
_TK_CAP = 2048                      # hidden_dim <= 2048 -> no K grid axis at all
_VMEM_CAP_BYTES = 48 * 1024 * 1024  # headroom under v7x's 64 MiB physical VMEM


def _ceil_to(x, m):
    return ((x + m - 1) // m) * m


def _pick_tile(n, align, cap):
    """Tile ~= ceil(n / ceil(n/cap)) rounded up to `align` -> minimal pad waste."""
    n_al = _ceil_to(n, align)
    if n_al <= cap:
        return n_al
    n_blocks = -(-n_al // cap)
    return min(_ceil_to(-(-n_al // n_blocks), align), cap)


def _hidden_kernel_single_k(x_ref, w_ref, b_ref, o_ref):
    """Whole K fits in one tile: single MXU pass, bias + ReLU fused at the store."""
    acc = jnp.dot(x_ref[...], w_ref[...], preferred_element_type=jnp.float32)
    o_ref[...] = jnp.maximum(acc + b_ref[...], 0.0).astype(o_ref.dtype)


def _hidden_kernel_k_reduce(x_ref, w_ref, b_ref, o_ref):
    """K-reduction grid axis (last): accumulate directly into the resident f32
    output block (no scratch accumulator); bias + ReLU on the final K step."""
    k = pl.program_id(2)

    @pl.when(k == 0)
    def _init():
        o_ref[...] = jnp.zeros_like(o_ref)

    o_ref[...] += jnp.dot(x_ref[...], w_ref[...], preferred_element_type=jnp.float32)

    @pl.when(k == pl.num_programs(2) - 1)
    def _finalize():
        o_ref[...] = jnp.maximum(o_ref[...] + b_ref[...], 0.0)


def make_hidden(hidden_dim, dout, *, use_bf16=True):
    """Returns (prepare_params, forward).

    prepare_params(w, b) pads/casts the weights ONCE (so forward never
    re-materializes W). forward(x, wp, bp) -> relu(x @ W + b) in f32.
    """
    in_dt = jnp.bfloat16 if use_bf16 else jnp.float32
    in_bytes = jnp.dtype(in_dt).itemsize
    m_align = 16 if use_bf16 else 8

    tn0 = _pick_tile(dout, 128, _TN_CAP)
    tk = _pick_tile(hidden_dim, 128, _TK_CAP)
    pD = _ceil_to(dout, tn0)
    pH = _ceil_to(hidden_dim, tk)

    def prepare_params(w, b):
        assert w.shape == (hidden_dim, dout) and b.shape == (dout,)
        wp = jnp.zeros((pH, pD), in_dt).at[:hidden_dim, :dout].set(w.astype(in_dt))
        bp = jnp.zeros((1, pD), jnp.float32).at[0, :dout].set(b.astype(jnp.float32))
        return wp, bp

    @jax.jit
    def forward(x, wp, bp):
        B, H = x.shape
        assert H == hidden_dim

        tm = _pick_tile(B, m_align, _TM_CAP)
        pB = _ceil_to(B, tm)
        gm, gk = pB // tm, pH // tk

        # v7x megacore: if both parallel axes would have a single block, split
        # the N (lane) axis so the second TensorCore gets work. Negligible cost
        # (~0.35 us extra grid step) on single-TC chips.
        tn, gn = tn0, pD // tn0
        lanes = pD // 128
        if gm == 1 and gn == 1 and lanes >= 2:
            for nb in range(2, lanes + 1):
                if lanes % nb == 0:
                    tn = (lanes // nb) * 128
                    gn = nb
                    break

        # Pad / cast the activations only when actually required.
        xp = x.astype(in_dt)
        if (pB, pH) != (B, H):
            xp = jnp.zeros((pB, pH), in_dt).at[:B, :H].set(xp)

        # Honest streamed-bytes estimate: x is re-read gn times, W gm times.
        cost = pl.CostEstimate(
            flops=2 * pB * pH * pD,
            transcendentals=0,
            bytes_accessed=(pB * pH * gn + pH * pD * gm) * in_bytes
            + pB * pD * 4 + pD * 4,
        )

        # Double-buffered x / W / bias / output tiles; set the limit explicitly
        # (scoped defaults: 16 MiB v5e, 32 MiB v6e/v7x), capped for v7x headroom.
        vmem_needed = 2 * (tm * tk * in_bytes + tk * tn * in_bytes
                           + tn * 4 + tm * tn * 4)
        vmem_limit = int(min(_VMEM_CAP_BYTES,
                             max(vmem_needed + (2 << 20), 16 << 20)))

        if gk == 1:
            grid = (gm, gn)
            kernel = _hidden_kernel_single_k
            in_specs = [
                pl.BlockSpec((tm, tk), lambda i, j: (i, 0)),   # x tile
                pl.BlockSpec((tk, tn), lambda i, j: (0, j)),   # W tile
                pl.BlockSpec((1, tn), lambda i, j: (0, j)),    # bias tile
            ]
            out_specs = pl.BlockSpec((tm, tn), lambda i, j: (i, j))
            dims = ("parallel", "parallel")
        else:
            grid = (gm, gn, gk)                                # K must stay LAST
            kernel = _hidden_kernel_k_reduce
            in_specs = [
                pl.BlockSpec((tm, tk), lambda i, j, k: (i, k)),
                pl.BlockSpec((tk, tn), lambda i, j, k: (k, j)),
                pl.BlockSpec((1, tn), lambda i, j, k: (0, j)),
            ]
            out_specs = pl.BlockSpec((tm, tn), lambda i, j, k: (i, j))
            dims = ("parallel", "parallel", "arbitrary")

        out_padded = pl.pallas_call(
            kernel,
            out_shape=jax.ShapeDtypeStruct((pB, pD), jnp.float32),
            grid=grid,
            in_specs=in_specs,
            out_specs=out_specs,
            compiler_params=pltpu.CompilerParams(
                dimension_semantics=dims,
                vmem_limit_bytes=vmem_limit,
            ),
            cost_estimate=cost,
        )(xp, wp, bp)

        if (pB, pD) != (B, dout):
            out_padded = out_padded[:B, :dout]
        return out_padded

    return prepare_params, forward


def init_params(key, hidden_dim, dout):
    # Mirrors nn.Linear default init: U(-k, k), k = 1/sqrt(fan_in).
    kw, kb = jax.random.split(key)
    bound = 1.0 / math.sqrt(hidden_dim)
    # PyTorch stores weight as (dout, hidden_dim); we keep the transpose.
    w = jax.random.uniform(kw, (hidden_dim, dout), jnp.float32, -bound, bound)
    b = jax.random.uniform(kb, (dout,), jnp.float32, -bound, bound)
    return w, b


def _ref_forward(x, w, b, use_bf16):
    if use_bf16:
        x = x.astype(jnp.bfloat16).astype(jnp.float32)
        w = w.astype(jnp.bfloat16).astype(jnp.float32)
    return jnp.maximum(x @ w + b, 0.0)


if __name__ == "__main__":
    key = jax.random.PRNGKey(0)
    kx, kp = jax.random.split(key)

    # 1) Small production-like shapes, exact f32 path (tight check).
    # TODO(synk): at these tiny shapes the layer should really be fused into the
    # surrounding network's kernel (or left to XLA); the tiling above targets
    # realistic (large B/H/D) sizes.
    B, Hd, D = 8, 32, 16
    x = jax.random.normal(kx, (B, Hd), jnp.float32)
    w, b = init_params(kp, Hd, D)

    prep_f32, fwd_f32 = make_hidden(Hd, D, use_bf16=False)
    wp, bp = prep_f32(w, b)
    out = jax.block_until_ready(fwd_f32(x, wp, bp))
    assert out.shape == (B, D)
    ref = _ref_forward(x, w, b, use_bf16=False)
    assert jnp.allclose(out, ref, atol=1e-5, rtol=1e-5), float(
        jnp.max(jnp.abs(out - ref)))

    # 2) Same shapes through the default bf16-input path.
    prep_bf, fwd_bf = make_hidden(Hd, D)          # use_bf16=True by default
    wp16, bp16 = prep_bf(w, b)
    out16 = jax.block_until_ready(fwd_bf(x, wp16, bp16))
    ref16 = _ref_forward(x, w, b, use_bf16=True)
    assert jnp.allclose(out16, ref16, atol=1e-3, rtol=1e-3), float(
        jnp.max(jnp.abs(out16 - ref16)))

    # 3) Multi-tile M/N, hidden_dim <= 2048 -> single-pass kernel (no K axis).
    B2, H2, D2 = 300, 640, 768
    kx2, kp2 = jax.random.split(jax.random.PRNGKey(1))
    x2 = jax.random.normal(kx2, (B2, H2), jnp.float32)
    w2, b2 = init_params(kp2, H2, D2)
    prep2, fwd2 = make_hidden(H2, D2)
    wp2, bp2 = prep2(w2, b2)
    out2 = jax.block_until_ready(fwd2(x2, wp2, bp2))
    assert out2.shape == (B2, D2)
    ref2 = _ref_forward(x2, w2, b2, use_bf16=True)
    assert jnp.allclose(out2, ref2, atol=5e-3, rtol=5e-3), float(
        jnp.max(jnp.abs(out2 - ref2)))

    # 4) hidden_dim > 2048 -> exercises the K-reduction / output-accumulator path.
    B3, H3, D3 = 64, 4096, 256
    kx3, kp3 = jax.random.split(jax.random.PRNGKey(2))
    x3 = jax.random.normal(kx3, (B3, H3), jnp.float32)
    w3, b3 = init_params(kp3, H3, D3)
    prep3, fwd3 = make_hidden(H3, D3)
    wp3, bp3 = prep3(w3, b3)
    out3 = jax.block_until_ready(fwd3(x3, wp3, bp3))
    assert out3.shape == (B3, D3)
    ref3 = _ref_forward(x3, w3, b3, use_bf16=True)
    assert jnp.allclose(out3, ref3, atol=5e-3, rtol=5e-3), float(
        jnp.max(jnp.abs(out3 - ref3)))

    print("KERNEL_OK")
</pallas_src>

<mosaic_0001>
module attributes {stable_mosaic.version = 11 : i64} {
  func.func @_hidden_kernel_single_k(%arg0: i32, %arg1: i32, %arg2: memref<8x128xf32, #tpu.memory_space<vmem>>, %arg3: memref<128x128xf32, #tpu.memory_space<vmem>>, %arg4: memref<1x128xf32, #tpu.memory_space<vmem>>, %arg5: memref<8x128xf32, #tpu.memory_space<vmem>>) attributes {dimension_semantics = [#tpu.dimension_semantics<parallel>, #tpu.dimension_semantics<parallel>], iteration_bounds = array<i64: 1, 1>, scalar_prefetch = 0 : i64, scratch_operands = 0 : i64, tpu.core_type = #tpu.core_type<tc>, window_params = [{transform_indices = @transform_0, window_bounds = array<i64: 8, 128>}, {transform_indices = @transform_1, window_bounds = array<i64: 128, 128>}, {transform_indices = @transform_2, window_bounds = array<i64: 1, 128>}, {transform_indices = @transform_3, window_bounds = array<i64: 8, 128>}]} {
    %c0 = arith.constant 0 : index
    %c0_0 = arith.constant 0 : index
    %0 = vector.load %arg2[%c0, %c0_0] : memref<8x128xf32, #tpu.memory_space<vmem>>, vector<8x128xf32>
    %c0_1 = arith.constant 0 : index
    %c0_2 = arith.constant 0 : index
    %1 = vector.load %arg3[%c0_1, %c0_2] : memref<128x128xf32, #tpu.memory_space<vmem>>, vector<128x128xf32>
    %cst = arith.constant dense<0.000000e+00> : vector<8x128xf32>
    %2 = tpu.matmul %0, %1, %cst {dimension_numbers = #tpu.dot_dimension_numbers<[1], [0], [0], [1], [0, 0, 1, 1], [], []>} : vector<8x128xf32>, vector<128x128xf32>, vector<8x128xf32> -> vector<8x128xf32>
    %c0_3 = arith.constant 0 : index
    %c0_4 = arith.constant 0 : index
    %3 = vector.load %arg4[%c0_3, %c0_4] : memref<1x128xf32, #tpu.memory_space<vmem>>, vector<1x128xf32>
    %4 = vector.broadcast %3 : vector<1x128xf32> to vector<8x128xf32>
    %5 = arith.addf %2, %4 : vector<8x128xf32>
    %cst_5 = arith.constant 0.000000e+00 : f32
    %6 = vector.broadcast %cst_5 : f32 to vector<8x128xf32>
    %7 = arith.maximumf %5, %6 : vector<8x128xf32>
    %c0_6 = arith.constant 0 : index
    %c0_7 = arith.constant 0 : index
    %8 = vector.load %arg5[%c0_6, %c0_7] : memref<8x128xf32, #tpu.memory_space<vmem>>, vector<8x128xf32>
    tpu.vector_store %arg5[%c0_6, %c0_7], %7 {strides = array<i32>} : memref<8x128xf32, #tpu.memory_space<vmem>>, vector<8x128xf32>,
    return
  }
  func.func @transform_0(%arg0: i32, %arg1: i32) -> (i32, i32) {
    %c0_i32 = arith.constant 0 : i32
    %c0_i32_0 = arith.constant 0 : i32
    return %arg0, %c0_i32 : i32, i32
  }
  func.func @transform_1(%arg0: i32, %arg1: i32) -> (i32, i32) {
    %c0_i32 = arith.constant 0 : i32
    %c0_i32_0 = arith.constant 0 : i32
    return %c0_i32, %arg1 : i32, i32
  }
  func.func @transform_2(%arg0: i32, %arg1: i32) -> (i32, i32) {
    %c0_i32 = arith.constant 0 : i32
    %c0_i32_0 = arith.constant 0 : i32
    return %c0_i32, %arg1 : i32, i32
  }
  func.func @transform_3(%arg0: i32, %arg1: i32) -> (i32, i32) {
    %c0_i32 = arith.constant 0 : i32
    return %arg0, %arg1 : i32, i32
  }
}

</mosaic_0001>

<llo_original>
// kernel: forward.1
$region0: #{forward.1}
  #allocation0 [shape = 'u32[]', space=smem, size = 0x4, offset = 0x4, fixed_abs, tag = 'smem constant byte address 0x4 - core index']
  #allocation1 [shape = 'u32[72,128]{1,0:T(1,128)}', space=vmem, size = 0x9000, scoped, tag = 'internal scratch']
  %s0 = inlined_call_operand.vmem [shape: f32[8,128], index: 0, kind: input, shape index: {}]
  %s1 = inlined_call_operand.hbm [shape: f32[128,128], index: 1, kind: input, shape index: {}]
  %s2 = inlined_call_operand.vmem [shape: f32[1,128], index: 2, kind: input, shape index: {}]
  %s3 = inlined_call_operand.hbm [shape: f32[8,128], index: 3, kind: output, shape index: {}]
  %s4 = sld [smem:[#allocation0]]
  $region26: #{forward.1} parent=0
    _
  %s6 = ssub.s32 1, %s4
  %s7 = scalar_select 0, %s6, %s4
  $region1: #{forward.1} parent=0
    #allocation2 [shape = 'u8[65536]{0}', space=vmem, size = 0x10000, scoped, tag = 'input window, operand 1, single buffered']
    #allocation3 [shape = 's32[1]{0}', space=sflag, size = 0x4, scoped, tag = 'scoped memory for forward.1']
    #allocation4 [shape = 's32[1]{0}', space=sflag, size = 0x4, scoped, tag = 'scoped memory for forward.1']
    #allocation5 [shape = 'u8[4096]{0}', space=vmem, size = 0x1000, scoped, tag = 'output window, operand 0, single buffered']
    %8 = vsyncpa [#allocation3], 0
    %9 = vsyncpa [#allocation4], 0
    // Predicated region
    $region2: #{forward.1} parent=1 // pred_check
      _
    $region3: #{forward.1} parent=1 // pred_check_branch
      %11 = sbr.rel (0) target = $region5
    $region4: #{forward.1} parent=1 // pred_region
      _
    $region5: #{forward.1} parent=1 // pred_fallthru
      _
    // Predicated region
    $region6: #{forward.1} parent=1 // pred_check
      _
    $region7: #{forward.1} parent=1 // pred_check_branch
      %13 = sbr.rel (0) target = $region9
    $region8: #{forward.1} parent=1 // pred_region
      %15 = vsyncadd [#allocation3], 0
      %s16 = sshll.u32 %s1, 4
      %s17 = int_to_ptr.hbm [resolvable:$true] %s16
      %s18 = sshll.u32 [#allocation2], 4
      %s19 = int_to_ptr.vmem [resolvable:$true] %s18
      %24 = dma.hbm_to_vmem [thread:$0]  %s17, 2048, %s19, [#allocation3], 128, 128, 8
    $region9: #{forward.1} parent=1 // pred_fallthru
      _
    // Predicated region
    $region10: #{forward.1} parent=1 // pred_check
      _
    $region11: #{forward.1} parent=1 // pred_check_branch
      %26 = sbr.rel (0) target = $region13
    $region12: #{forward.1} parent=1 // pred_region
      _
    $region13: #{forward.1} parent=1 // pred_fallthru
      _
    // Predicated region
    $region14: #{forward.1} parent=1 // pred_check
      _
    $region15: #{forward.1} parent=1 // pred_check_branch
      %28 = sbr.rel (0) target = $region17
    $region16: #{forward.1} parent=1 // pred_region
      %30 = dma.done [#allocation3], 2048
    $region17: #{forward.1} parent=1 // pred_fallthru
      _
    %v31 = vld [vmem:[%s0] sm:$0xff]
    %v32 = vld [vmem:[#allocation2] sm:$0xff]
    %v33 = vld [vmem:[#allocation2 + $0x8] sm:$0xff]
    %v34 = vld [vmem:[#allocation2 + $0x10] sm:$0xff]
    %v35 = vld [vmem:[#allocation2 + $0x18] sm:$0xff]
    %v36 = vld [vmem:[#allocation2 + $0x20] sm:$0xff]
    %v37 = vld [vmem:[#allocation2 + $0x28] sm:$0xff]
    %v38 = vld [vmem:[#allocation2 + $0x30] sm:$0xff]
    %v39 = vld [vmem:[#allocation2 + $0x38] sm:$0xff]
    %v40 = vld [vmem:[#allocation2 + $0x40] sm:$0xff]
    %v41 = vld [vmem:[#allocation2 + $0x48] sm:$0xff]
    %v42 = vld [vmem:[#allocation2 + $0x50] sm:$0xff]
    %v43 = vld [vmem:[#allocation2 + $0x58] sm:$0xff]
    %v44 = vld [vmem:[#allocation2 + $0x60] sm:$0xff]
    %v45 = vld [vmem:[#allocation2 + $0x68] sm:$0xff]
    %v46 = vld [vmem:[#allocation2 + $0x70] sm:$0xff]
    %v47 = vld [vmem:[#allocation2 + $0x78] sm:$0xff]
    %v48 = vld [vmem:[%s2] sm:$0x1]
    %v50 = vperm.slane %v48, 0
    %52 = vmatpush.msra.mxu0 %v47
    %53 = vmatpush.msra.mxu0 %v46
    %54 = vmatpush.msra.mxu0 %v45
    %55 = vmatpush.msra.mxu0 %v44
    %56 = vmatpush.msra.mxu0 %v43
    %57 = vmatpush.msra.mxu0 %v42
    %58 = vmatpush.msra.mxu0 %v41
    %59 = vmatpush.msra.mxu0 %v40
    %60 = vmatpush.msra.mxu0 %v39
    %61 = vmatpush.msra.mxu0 %v38
    %62 = vmatpush.msra.mxu0 %v37
    %63 = vmatpush.msra.mxu0 %v36
    %64 = vmatpush.msra.mxu0 %v35
    %65 = vmatpush.msra.mxu0 %v34
    %66 = vmatpush.msra.mxu0 %v33
    %67 = vmatpush.msra.mxu0 %v32
    %68 = vmatmul.f32.gmra.mxu0 %v31
    %v69 = vpop.f32.mrf.mxu0
    %v70 = vadd.f32 %v50, %v69
    %71 = vdwg.mxu0
    %v72 = vmax.f32 %v70, 0.0
    %73 = vst [vmem:[#allocation5] sm:$0xff] %v72
    // Predicated region
    $region18: #{forward.1} parent=1 // pred_check
      _
    $region19: #{forward.1} parent=1 // pred_check_branch
      %75 = sbr.rel (0) target = $region21
    $region20: #{forward.1} parent=1 // pred_region
      %77 = vsyncadd [#allocation4], 0
      %s79 = sshll.u32 [#allocation5], 4
      %s80 = int_to_ptr.vmem [resolvable:$true] %s79
      %s81 = sshll.u32 %s3, 4
      %s82 = int_to_ptr.hbm [resolvable:$true] %s81
      %84 = dma.vmem_to_hbm [thread:$0]  %s80, 128, %s82, [#allocation4]
    $region21: #{forward.1} parent=1 // pred_fallthru
      _
    // Predicated region
    $region22: #{forward.1} parent=1 // pred_check
      _
    $region23: #{forward.1} parent=1 // pred_check_branch
      %86 = sbr.rel (0) target = $region25
    $region24: #{forward.1} parent=1 // pred_region
      %88 = dma.done [#allocation4], 128
    $region25: #{forward.1} parent=1 // pred_fallthru
      _
    %89 = vsyncpa [#allocation3], 1
    %90 = vsyncpa [#allocation4], 1

</llo_original>
